<compile_context>
chip_gen: v5e
topology: v5e:2x2
jax: 0.10.0
libtpu: 0.0.40
codegen_flags: <defaults>
</compile_context>

<pallas_src>
import jax
import jax.numpy as jnp
from jax import lax
from jax.experimental import pallas as pl
from jax.experimental.pallas import tpu as pltpu

# Problem sizes (small, consistent with the module's forward).
B, CIN, H, W = 2, 4, 16, 16          # input images, NCHW on the PyTorch side
KH = KW = 3                           # conv kernel
FEATURE_DIM = 32                      # backbone.feature_dim
N_CLASSES = 10                        # classifier output
HW = H * W                            # 256
PATCH = KH * KW * CIN                 # 36
BHW = B * HW                          # 512


def basic_ce_kernel(pT_ref, wcT_ref, wlT_ref, out_ref):
    """Single invocation, whole problem resident in VMEM (<100 KB).

    pT_ref:  (PATCH+1, BHW)   = (37, 512)  im2col patches^T; last row is all ones
    wcT_ref: (F+1, PATCH+1)   = (33, 37)   rows 0:F = [Wc^T | b_conv], last row [0..0 1]
    wlT_ref: (N_CLASSES, F+1) = (10, 33)   [W_cls | b_cls]
    out_ref: (F+N_CLASSES, B) = (42, 2)    rows 0:32 = feat^T, rows 32:42 = logits^T
    """
    # Conv-as-matmul for the whole batch, conv bias folded in (MXU): (33,37)@(37,512).
    act = jnp.maximum(
        jnp.dot(wcT_ref[...], pT_ref[...], preferred_element_type=jnp.float32), 0.0)
    # Row FEATURE_DIM of `act` is all ones (bias row survives ReLU, pools to exactly 1).
    # Global average pool per image: 128-aligned lane reductions (XLU), no pool matrix.
    inv_hw = 1.0 / float(HW)
    feat_aug = jnp.concatenate(
        [jnp.sum(act[:, b * HW:(b + 1) * HW], axis=-1, keepdims=True)
         for b in range(B)], axis=-1) * inv_hw                          # (F+1, B)
    # Classifier with folded bias (MXU): (10,33)@(33,2).
    logits_t = jnp.dot(wlT_ref[...], feat_aug, preferred_element_type=jnp.float32)
    out_ref[0:FEATURE_DIM, :] = feat_aug[0:FEATURE_DIM, :]
    out_ref[FEATURE_DIM:FEATURE_DIM + N_CLASSES, :] = logits_t


def basic_ce_forward(x_nchw, w_conv, b_conv, w_cls, b_cls):
    """x_nchw: (B, CIN, H, W) float32.

    Returns (feature_map (B, FEATURE_DIM), logits (B, N_CLASSES)).
    """
    # ---- glue (fused / constant-folded by XLA under jit): NCHW -> NHWC, pad, im2col --
    x = jnp.transpose(x_nchw, (0, 2, 3, 1))                             # (B, H, W, CIN)
    xpad = jnp.pad(x, ((0, 0), (1, 1), (1, 1), (0, 0)))                 # (B, H+2, W+2, CIN)
    pieces = [xpad[:, ky:ky + H, kx:kx + W, :]
              for ky in range(KH) for kx in range(KW)]                  # each (B,H,W,CIN)
    # Row (b*HW + y*W + x); column (tap*CIN + ci) -- matches w_conv.reshape below.
    patches = jnp.concatenate(pieces, axis=-1).reshape(BHW, PATCH)      # (512, 36)
    # Append a ones column (bias fold), then transpose so BHW is the lane axis.
    patches_aug_t = jnp.concatenate(
        [patches, jnp.ones((BHW, 1), jnp.float32)], axis=-1).T          # (37, 512)

    # Conv weight (KH, KW, CIN, COUT) -> (PATCH, COUT); row-major matches patch order.
    wc_mat = w_conv.reshape(PATCH, FEATURE_DIM)                         # (36, 32)
    wcT_aug = jnp.concatenate([
        jnp.concatenate([wc_mat.T, b_conv[:, None]], axis=1),           # (32, 37)
        jnp.concatenate([jnp.zeros((1, PATCH), jnp.float32),
                         jnp.ones((1, 1), jnp.float32)], axis=1),       # (1, 37)
    ], axis=0)                                                          # (33, 37)
    # PyTorch Linear stores (out, in); fold its bias as an extra column.
    wl_aug = jnp.concatenate([w_cls, b_cls[:, None]], axis=1)           # (10, 33)

    flops = (2 * (FEATURE_DIM + 1) * (PATCH + 1) * BHW
             + 2 * N_CLASSES * (FEATURE_DIM + 1) * B)
    bytes_accessed = 4 * ((PATCH + 1) * BHW
                          + (FEATURE_DIM + 1) * (PATCH + 1)
                          + N_CLASSES * (FEATURE_DIM + 1)
                          + (FEATURE_DIM + N_CLASSES) * B)

    out = pl.pallas_call(
        basic_ce_kernel,
        out_shape=jax.ShapeDtypeStruct((FEATURE_DIM + N_CLASSES, B), jnp.float32),
        in_specs=[pl.BlockSpec(memory_space=pltpu.MemorySpace.VMEM)] * 3,
        out_specs=pl.BlockSpec(memory_space=pltpu.MemorySpace.VMEM),
        cost_estimate=pl.CostEstimate(flops=flops, transcendentals=0,
                                      bytes_accessed=bytes_accessed),
    )(patches_aug_t, wcT_aug, wl_aug)

    feat = out[:FEATURE_DIM, :].T                                       # (B, F)
    logits = out[FEATURE_DIM:, :].T                                     # (B, N_CLASSES)
    return feat, logits


def reference_forward(x_nchw, w_conv, b_conv, w_cls, b_cls):
    """Plain-JAX reference (NHWC conv + ReLU + GAP + Linear)."""
    x = jnp.transpose(x_nchw, (0, 2, 3, 1))                             # NHWC
    conv = lax.conv_general_dilated(
        x, w_conv, window_strides=(1, 1), padding="SAME",
        dimension_numbers=("NHWC", "HWIO", "NHWC"))
    act = jnp.maximum(conv + b_conv[None, None, None, :], 0.0)
    feat = jnp.mean(act, axis=(1, 2))                                   # (B, FEATURE_DIM)
    logits = feat @ w_cls.T + b_cls[None, :]
    return feat, logits


if __name__ == "__main__":
    key = jax.random.PRNGKey(0)
    kx, kwc, kbc, kwl, kbl = jax.random.split(key, 5)

    x = jax.random.normal(kx, (B, CIN, H, W), dtype=jnp.float32)
    # Deterministic synthetic parameters (backbone conv + classifier Linear).
    w_conv = jax.random.normal(kwc, (KH, KW, CIN, FEATURE_DIM), dtype=jnp.float32) * 0.1
    b_conv = jax.random.normal(kbc, (FEATURE_DIM,), dtype=jnp.float32) * 0.1
    w_cls = jax.random.normal(kwl, (N_CLASSES, FEATURE_DIM), dtype=jnp.float32) * 0.1
    b_cls = jax.random.normal(kbl, (N_CLASSES,), dtype=jnp.float32) * 0.1

    feat, logits = jax.jit(basic_ce_forward)(x, w_conv, b_conv, w_cls, b_cls)
    jax.block_until_ready((feat, logits))

    feat_ref, logits_ref = reference_forward(x, w_conv, b_conv, w_cls, b_cls)
    assert feat.shape == (B, FEATURE_DIM) and logits.shape == (B, N_CLASSES)
    assert jnp.allclose(feat, feat_ref, atol=1e-4, rtol=1e-4)
    assert jnp.allclose(logits, logits_ref, atol=1e-4, rtol=1e-4)

    print("KERNEL_OK")
</pallas_src>

<mosaic_0001>
module attributes {stable_mosaic.version = 11 : i64} {
  func.func @basic_ce_kernel(%arg0: memref<37x512xf32, #tpu.memory_space<vmem>>, %arg1: memref<33x37xf32, #tpu.memory_space<vmem>>, %arg2: memref<10x33xf32, #tpu.memory_space<vmem>>, %arg3: memref<42x2xf32, #tpu.memory_space<vmem>>) attributes {dimension_semantics = [], scalar_prefetch = 0 : i64, scratch_operands = 0 : i64, tpu.core_type = #tpu.core_type<tc>} {
    %c0 = arith.constant 0 : index
    %c0_0 = arith.constant 0 : index
    %0 = vector.load %arg1[%c0, %c0_0] : memref<33x37xf32, #tpu.memory_space<vmem>>, vector<33x37xf32>
    %c0_1 = arith.constant 0 : index
    %c0_2 = arith.constant 0 : index
    %1 = vector.load %arg0[%c0_1, %c0_2] : memref<37x512xf32, #tpu.memory_space<vmem>>, vector<37x512xf32>
    %cst = arith.constant dense<0.000000e+00> : vector<33x512xf32>
    %2 = tpu.matmul %0, %1, %cst {dimension_numbers = #tpu.dot_dimension_numbers<[1], [0], [0], [1], [0, 0, 1, 1], [], []>} : vector<33x37xf32>, vector<37x512xf32>, vector<33x512xf32> -> vector<33x512xf32>
    %cst_3 = arith.constant 0.000000e+00 : f32
    %3 = vector.broadcast %cst_3 : f32 to vector<33x512xf32>
    %4 = arith.maximumf %2, %3 : vector<33x512xf32>
    %5 = vector.extract_strided_slice %4 {offsets = [0, 0], sizes = [33, 256], strides = [1, 1]} : vector<33x512xf32> to vector<33x256xf32>
    %cst_4 = arith.constant dense<0.000000e+00> : vector<33xf32>
    %6 = vector.multi_reduction <add>, %5, %cst_4 [1] : vector<33x256xf32> to vector<33xf32>
    %7 = vector.shape_cast %6 : vector<33xf32> to vector<33x1xf32>
    %8 = vector.extract_strided_slice %4 {offsets = [0, 256], sizes = [33, 256], strides = [1, 1]} : vector<33x512xf32> to vector<33x256xf32>
    %cst_5 = arith.constant dense<0.000000e+00> : vector<33xf32>
    %9 = vector.multi_reduction <add>, %8, %cst_5 [1] : vector<33x256xf32> to vector<33xf32>
    %10 = vector.shape_cast %9 : vector<33xf32> to vector<33x1xf32>
    %11 = tpu.concatenate %7, %10 in 1 : vector<33x1xf32>, vector<33x1xf32> -> vector<33x2xf32>
    %cst_6 = arith.constant 3.906250e-03 : f32
    %12 = vector.broadcast %cst_6 : f32 to vector<33x2xf32>
    %13 = arith.mulf %11, %12 : vector<33x2xf32>
    %c0_7 = arith.constant 0 : index
    %c0_8 = arith.constant 0 : index
    %14 = vector.load %arg2[%c0_7, %c0_8] : memref<10x33xf32, #tpu.memory_space<vmem>>, vector<10x33xf32>
    %cst_9 = arith.constant dense<0.000000e+00> : vector<10x2xf32>
    %15 = tpu.matmul %14, %13, %cst_9 {dimension_numbers = #tpu.dot_dimension_numbers<[1], [0], [0], [1], [0, 0, 1, 1], [], []>} : vector<10x33xf32>, vector<33x2xf32>, vector<10x2xf32> -> vector<10x2xf32>
    %16 = vector.extract_strided_slice %13 {offsets = [0, 0], sizes = [32, 2], strides = [1, 1]} : vector<33x2xf32> to vector<32x2xf32>
    %c0_10 = arith.constant 0 : index
    %c0_11 = arith.constant 0 : index
    %17 = vector.load %arg3[%c0_10, %c0_11] : memref<42x2xf32, #tpu.memory_space<vmem>>, vector<32x2xf32>
    tpu.vector_store %arg3[%c0_10, %c0_11], %16 {strides = array<i32>} : memref<42x2xf32, #tpu.memory_space<vmem>>, vector<32x2xf32>,
    %c32 = arith.constant 32 : index
    %c0_12 = arith.constant 0 : index
    %18 = vector.load %arg3[%c32, %c0_12] : memref<42x2xf32, #tpu.memory_space<vmem>>, vector<10x2xf32>
    tpu.vector_store %arg3[%c32, %c0_12], %15 {strides = array<i32>} : memref<42x2xf32, #tpu.memory_space<vmem>>, vector<10x2xf32>,
    return
  }
}

</mosaic_0001>

<llo_original>
// kernel: basic_ce_forward.1
$region0: #{basic_ce_forward.1}
  #allocation0 [shape = 'u32[]', space=smem, size = 0x4, offset = 0x4, fixed_abs, tag = 'smem constant byte address 0x4 - core index']
  #allocation1 [shape = 'u32[72,128]{1,0:T(1,128)}', space=vmem, size = 0x9000, scoped, tag = 'internal scratch']
  %s0 = inlined_call_operand.vmem [shape: f32[37,512], index: 0, kind: input, shape index: {}]
  %s1 = inlined_call_operand.vmem [shape: f32[33,37], index: 1, kind: input, shape index: {}]
  %s2 = inlined_call_operand.vmem [shape: f32[10,33], index: 2, kind: input, shape index: {}]
  %s3 = inlined_call_operand.vmem [shape: f32[42,2], index: 3, kind: output, shape index: {}]
  %s4 = sld [smem:[#allocation0]]
  $region22: #{basic_ce_forward.1} parent=0
    _
  %s6 = ssub.s32 1, %s4
  %s7 = scalar_select 0, %s6, %s4
  // Predicated region
  $region2: #{basic_ce_forward.1} parent=0 // pred_check
    _
  $region3: #{basic_ce_forward.1} parent=0 // pred_check_branch
    %9 = sbr.rel (0) target = $region5
  $region4: #{basic_ce_forward.1} parent=0 // pred_region
    _
  $region5: #{basic_ce_forward.1} parent=0 // pred_fallthru
    _
  // Predicated region
  $region6: #{basic_ce_forward.1} parent=0 // pred_check
    _
  $region7: #{basic_ce_forward.1} parent=0 // pred_check_branch
    %11 = sbr.rel (0) target = $region9
  $region8: #{basic_ce_forward.1} parent=0 // pred_region
    _
  $region9: #{basic_ce_forward.1} parent=0 // pred_fallthru
    _
  // Predicated region
  $region10: #{basic_ce_forward.1} parent=0 // pred_check
    _
  $region11: #{basic_ce_forward.1} parent=0 // pred_check_branch
    %13 = sbr.rel (0) target = $region13
  $region12: #{basic_ce_forward.1} parent=0 // pred_region
    _
  $region13: #{basic_ce_forward.1} parent=0 // pred_fallthru
    _
  %v14 = vld [vmem:[%s1] sm:$0xff]
  %v15 = vld [vmem:[%s1 + $0x8] sm:$0xff]
  %v16 = vld [vmem:[%s1 + $0x10] sm:$0xff]
  %v17 = vld [vmem:[%s1 + $0x18] sm:$0xff]
  %v18 = vld [vmem:[%s1 + $0x20] sm:$0x1]
  %v19 = vld [vmem:[%s0] sm:$0xff]
  %v20 = vld [vmem:[%s0 + $0x8] sm:$0xff]
  %v21 = vld [vmem:[%s0 + $0x10] sm:$0xff]
  %v22 = vld [vmem:[%s0 + $0x18] sm:$0xff]
  %v23 = vld [vmem:[%s0 + $0x20] sm:$0xff]
  %v24 = vld [vmem:[%s0 + $0x28] sm:$0xff]
  %v25 = vld [vmem:[%s0 + $0x30] sm:$0xff]
  %v26 = vld [vmem:[%s0 + $0x38] sm:$0xff]
  %v27 = vld [vmem:[%s0 + $0x40] sm:$0xff]
  %v28 = vld [vmem:[%s0 + $0x48] sm:$0xff]
  %v29 = vld [vmem:[%s0 + $0x50] sm:$0xff]
  %v30 = vld [vmem:[%s0 + $0x58] sm:$0xff]
  %v31 = vld [vmem:[%s0 + $0x60] sm:$0xff]
  %v32 = vld [vmem:[%s0 + $0x68] sm:$0xff]
  %v33 = vld [vmem:[%s0 + $0x70] sm:$0xff]
  %v34 = vld [vmem:[%s0 + $0x78] sm:$0xff]
  %v35 = vld [vmem:[%s0 + $0x80] sm:$0x1f]
  %v36 = vld [vmem:[%s0 + $0x88] sm:$0x1f]
  %v37 = vld [vmem:[%s0 + $0x90] sm:$0x1f]
  %v38 = vld [vmem:[%s0 + $0x98] sm:$0x1f]
  %vm39 = vcmask 302080
  %v41 = vsel %vm39, %v14, 0
  %v44 = vsel %vm39, %v15, 0
  %v47 = vsel %vm39, %v16, 0
  %v50 = vsel %vm39, %v17, 0
  %v53 = vsel %vm39, %v18, 0
  %vm55 = vcmask 1044480
  %v57 = vsel %vm55, %v35, 0
  %v60 = vsel %vm55, %v36, 0
  %v63 = vsel %vm55, %v37, 0
  %v66 = vsel %vm55, %v38, 0
  %68 = vmatpush.msra.mxu0 0.0
  %69 = vmatpush.msra.mxu0 0.0
  %70 = vmatpush.msra.mxu0 0.0
  %71 = vmatpush.msra.mxu0 0.0
  %72 = vmatpush.msra.mxu0 0.0
  %73 = vmatpush.msra.mxu0 0.0
  %74 = vmatpush.msra.mxu0 0.0
  %75 = vmatpush.msra.mxu0 0.0
  %76 = vmatpush.msra.mxu0 0.0
  %77 = vmatpush.msra.mxu0 0.0
  %78 = vmatpush.msra.mxu0 0.0
  %79 = vmatpush.msra.mxu0 %v57
  %80 = vmatpush.msra.mxu0 %v31
  %81 = vmatpush.msra.mxu0 %v27
  %82 = vmatpush.msra.mxu0 %v23
  %83 = vmatpush.msra.mxu0 %v19
  %84 = vmatmul.f32.gmra.mxu0 %v41
  %v85 = vpop.f32.mrf.mxu0
  %v86 = vadd.f32 0.0, %v85
  %87 = vmatmul.f32.gmra.mxu0 %v44
  %v88 = vpop.f32.mrf.mxu0
  %v89 = vadd.f32 0.0, %v88
  %90 = vmatmul.f32.gmra.mxu0 %v47
  %v91 = vpop.f32.mrf.mxu0
  %v92 = vadd.f32 0.0, %v91
  %93 = vmatmul.f32.gmra.mxu0 %v50
  %v94 = vpop.f32.mrf.mxu0
  %v95 = vadd.f32 0.0, %v94
  %96 = vmatmul.f32.gmra.mxu0 %v53
  %v97 = vpop.f32.mrf.mxu0
  %v98 = vadd.f32 0.0, %v97
  %99 = vdwg.mxu0
  %100 = vmatpush.msra.mxu0 0.0
  %101 = vmatpush.msra.mxu0 0.0
  %102 = vmatpush.msra.mxu0 0.0
  %103 = vmatpush.msra.mxu0 0.0
  %104 = vmatpush.msra.mxu0 0.0
  %105 = vmatpush.msra.mxu0 0.0
  %106 = vmatpush.msra.mxu0 0.0
  %107 = vmatpush.msra.mxu0 0.0
  %108 = vmatpush.msra.mxu0 0.0
  %109 = vmatpush.msra.mxu0 0.0
  %110 = vmatpush.msra.mxu0 0.0
  %111 = vmatpush.msra.mxu0 %v60
  %112 = vmatpush.msra.mxu0 %v32
  %113 = vmatpush.msra.mxu0 %v28
  %114 = vmatpush.msra.mxu0 %v24
  %115 = vmatpush.msra.mxu0 %v20
  %116 = vmatmul.f32.gmra.mxu0 %v41
  %v117 = vpop.f32.mrf.mxu0
  %v118 = vadd.f32 0.0, %v117
  %119 = vmatmul.f32.gmra.mxu0 %v44
  %v120 = vpop.f32.mrf.mxu0
  %v121 = vadd.f32 0.0, %v120
  %122 = vmatmul.f32.gmra.mxu0 %v47
  %v123 = vpop.f32.mrf.mxu0
  %v124 = vadd.f32 0.0, %v123
  %125 = vmatmul.f32.gmra.mxu0 %v50
  %v126 = vpop.f32.mrf.mxu0
  %v127 = vadd.f32 0.0, %v126
  %128 = vmatmul.f32.gmra.mxu0 %v53
  %v129 = vpop.f32.mrf.mxu0
  %v130 = vadd.f32 0.0, %v129
  %131 = vdwg.mxu0
  %132 = vmatpush.msra.mxu0 0.0
  %133 = vmatpush.msra.mxu0 0.0
  %134 = vmatpush.msra.mxu0 0.0
  %135 = vmatpush.msra.mxu0 0.0
  %136 = vmatpush.msra.mxu0 0.0
  %137 = vmatpush.msra.mxu0 0.0
  %138 = vmatpush.msra.mxu0 0.0
  %139 = vmatpush.msra.mxu0 0.0
  %140 = vmatpush.msra.mxu0 0.0
  %141 = vmatpush.msra.mxu0 0.0
  %142 = vmatpush.msra.mxu0 0.0
  %143 = vmatpush.msra.mxu0 %v63
  %144 = vmatpush.msra.mxu0 %v33
  %145 = vmatpush.msra.mxu0 %v29
  %146 = vmatpush.msra.mxu0 %v25
  %147 = vmatpush.msra.mxu0 %v21
  %148 = vmatmul.f32.gmra.mxu0 %v41
  %v149 = vpop.f32.mrf.mxu0
  %v150 = vadd.f32 0.0, %v149
  %151 = vmatmul.f32.gmra.mxu0 %v44
  %v152 = vpop.f32.mrf.mxu0
  %v153 = vadd.f32 0.0, %v152
  %154 = vmatmul.f32.gmra.mxu0 %v47
  %v155 = vpop.f32.mrf.mxu0
  %v156 = vadd.f32 0.0, %v155
  %157 = vmatmul.f32.gmra.mxu0 %v50
  %v158 = vpop.f32.mrf.mxu0
  %v159 = vadd.f32 0.0, %v158
  %160 = vmatmul.f32.gmra.mxu0 %v53
  %v161 = vpop.f32.mrf.mxu0
  %v162 = vadd.f32 0.0, %v161
  %163 = vdwg.mxu0
  %164 = vmatpush.msra.mxu0 0.0
  %165 = vmatpush.msra.mxu0 0.0
  %166 = vmatpush.msra.mxu0 0.0
  %167 = vmatpush.msra.mxu0 0.0
  %168 = vmatpush.msra.mxu0 0.0
  %169 = vmatpush.msra.mxu0 0.0
  %170 = vmatpush.msra.mxu0 0.0
  %171 = vmatpush.msra.mxu0 0.0
  %172 = vmatpush.msra.mxu0 0.0
  %173 = vmatpush.msra.mxu0 0.0
  %174 = vmatpush.msra.mxu0 0.0
  %175 = vmatpush.msra.mxu0 %v66
  %176 = vmatpush.msra.mxu0 %v34
  %177 = vmatpush.msra.mxu0 %v30
  %178 = vmatpush.msra.mxu0 %v26
  %179 = vmatpush.msra.mxu0 %v22
  %180 = vmatmul.f32.gmra.mxu0 %v41
  %v181 = vpop.f32.mrf.mxu0
  %v182 = vadd.f32 0.0, %v181
  %183 = vmatmul.f32.gmra.mxu0 %v44
  %v184 = vpop.f32.mrf.mxu0
  %v185 = vadd.f32 0.0, %v184
  %186 = vmatmul.f32.gmra.mxu0 %v47
  %v187 = vpop.f32.mrf.mxu0
  %v188 = vadd.f32 0.0, %v187
  %189 = vmatmul.f32.gmra.mxu0 %v50
  %v190 = vpop.f32.mrf.mxu0
  %v191 = vadd.f32 0.0, %v190
  %192 = vmatmul.f32.gmra.mxu0 %v53
  %v193 = vpop.f32.mrf.mxu0
  %v194 = vadd.f32 0.0, %v193
  %195 = vdwg.mxu0
  %v196 = vmax.f32 %v86, 0.0
  %v197 = vmax.f32 %v118, 0.0
  %v198 = vmax.f32 %v150, 0.0
  %v199 = vmax.f32 %v182, 0.0
  %v200 = vmax.f32 %v89, 0.0
  %v201 = vmax.f32 %v121, 0.0
  %v202 = vmax.f32 %v153, 0.0
  %v203 = vmax.f32 %v185, 0.0
  %v204 = vmax.f32 %v92, 0.0
  %v205 = vmax.f32 %v124, 0.0
  %v206 = vmax.f32 %v156, 0.0
  %v207 = vmax.f32 %v188, 0.0
  %v208 = vmax.f32 %v95, 0.0
  %v209 = vmax.f32 %v127, 0.0
  %v210 = vmax.f32 %v159, 0.0
  %v211 = vmax.f32 %v191, 0.0
  %v212 = vmax.f32 %v98, 0.0
  %v213 = vmax.f32 %v130, 0.0
  %v214 = vmax.f32 %v162, 0.0
  %v215 = vmax.f32 %v194, 0.0
  %v216 = vadd.f32 %v196, %v197
  %217 = vadd.xlane.f32.xlu0 %v216
  %v218 = vpop.xlane.xlu0 %217
  %v219 = vadd.f32 %v200, %v201
  %220 = vadd.xlane.f32.xlu0 %v219
  %v221 = vpop.xlane.xlu0 %220
  %v222 = vadd.f32 %v204, %v205
  %223 = vadd.xlane.f32.xlu0 %v222
  %v224 = vpop.xlane.xlu0 %223
  %v225 = vadd.f32 %v208, %v209
  %226 = vadd.xlane.f32.xlu0 %v225
  %v227 = vpop.xlane.xlu0 %226
  %vm228 = vcmask 1040384
  %v229 = vsel %vm228, %v212, 0.0
  %v230 = vsel %vm228, %v213, 0.0
  %v231 = vadd.f32 %v229, %v230
  %232 = vadd.xlane.f32.xlu0 %v231
  %v233 = vpop.xlane.xlu0 %232
  %v234 = vadd.f32 %v198, %v199
  %235 = vadd.xlane.f32.xlu0 %v234
  %v236 = vpop.xlane.xlu0 %235
  %v237 = vadd.f32 %v202, %v203
  %238 = vadd.xlane.f32.xlu0 %v237
  %v239 = vpop.xlane.xlu0 %238
  %v240 = vadd.f32 %v206, %v207
  %241 = vadd.xlane.f32.xlu0 %v240
  %v242 = vpop.xlane.xlu0 %241
  %v243 = vadd.f32 %v210, %v211
  %244 = vadd.xlane.f32.xlu0 %v243
  %v245 = vpop.xlane.xlu0 %244
  %v246 = vsel %vm228, %v214, 0.0
  %v247 = vsel %vm228, %v215, 0.0
  %v248 = vadd.f32 %v246, %v247
  %249 = vadd.xlane.f32.xlu0 %v248
  %v250 = vpop.xlane.xlu0 %249
  %vm251 = vcmask 7168
  %v252 = vsel %vm251, %v218, %v236
  %v253 = vsel %vm251, %v221, %v239
  %v254 = vsel %vm251, %v224, %v242
  %v255 = vsel %vm251, %v227, %v245
  %v256 = vsel %vm251, %v233, %v250
  %v257 = vmul.f32 %v252, 0.00390625
  %v258 = vmul.f32 %v253, 0.00390625
  %v259 = vmul.f32 %v254, 0.00390625
  %v260 = vmul.f32 %v255, 0.00390625
  %v261 = vmul.f32 %v256, 0.00390625
  %v262 = vld [vmem:[%s2] sm:$0xff]
  %v263 = vld [vmem:[%s2 + $0x8] sm:$0x3]
  %vm264 = vcmask 269312
  %v266 = vsel %vm264, %v262, 0
  %v269 = vsel %vm264, %v263, 0
  %v272 = vsel %vm228, %v261, 0
  %274 = vmatpush.msra.mxu0 0.0
  %275 = vmatpush.msra.mxu0 0.0
  %276 = vmatpush.msra.mxu0 0.0
  %277 = vmatpush.msra.mxu0 0.0
  %278 = vmatpush.msra.mxu0 0.0
  %279 = vmatpush.msra.mxu0 0.0
  %280 = vmatpush.msra.mxu0 0.0
  %281 = vmatpush.msra.mxu0 0.0
  %282 = vmatpush.msra.mxu0 0.0
  %283 = vmatpush.msra.mxu0 0.0
  %284 = vmatpush.msra.mxu0 0.0
  %285 = vmatpush.msra.mxu0 %v272
  %286 = vmatpush.msra.mxu0 %v260
  %287 = vmatpush.msra.mxu0 %v259
  %288 = vmatpush.msra.mxu0 %v258
  %289 = vmatpush.msra.mxu0 %v257
  %290 = vmatmul.f32.gmra.mxu0 %v266
  %v291 = vpop.f32.mrf.mxu0
  %v292 = vadd.f32 0.0, %v291
  %293 = vmatmul.f32.gmra.mxu0 %v269
  %v294 = vpop.f32.mrf.mxu0
  %v295 = vadd.f32 0.0, %v294
  %296 = vdwg.mxu0
  %vm297 = vcmask 15360
  %298 = vst.msk [vmem:[%s3] sm:$0xff] %vm297, %v257
  %299 = vst.msk [vmem:[%s3 + $0x8] sm:$0xff] %vm297, %v258
  %300 = vst.msk [vmem:[%s3 + $0x10] sm:$0xff] %vm297, %v259
  %301 = vst.msk [vmem:[%s3 + $0x18] sm:$0xff] %vm297, %v260
  %302 = vst.msk [vmem:[%s3 + $0x20] sm:$0xff] %vm297, %v292
  %vm303 = vcmask 9216
  %304 = vst.msk [vmem:[%s3 + $0x28] sm:$0x3] %vm303, %v295
  // Predicated region
  $region14: #{basic_ce_forward.1} parent=0 // pred_check
    _
  $region15: #{basic_ce_forward.1} parent=0 // pred_check_branch
    %306 = sbr.rel (0) target = $region17
  $region16: #{basic_ce_forward.1} parent=0 // pred_region
    _
  $region17: #{basic_ce_forward.1} parent=0 // pred_fallthru
    _
  // Predicated region
  $region18: #{basic_ce_forward.1} parent=0 // pred_check
    _
  $region19: #{basic_ce_forward.1} parent=0 // pred_check_branch
    %308 = sbr.rel (0) target = $region21
  $region20: #{basic_ce_forward.1} parent=0 // pred_region
    _
  $region21: #{basic_ce_forward.1} parent=0 // pred_fallthru
    _

</llo_original>
